<compile_context>
chip_gen: v7x
topology: tpu7x:2x2x1
jax: 0.10.0
libtpu: 0.0.40
codegen_flags: <defaults>
</compile_context>

<pallas_src>
import jax
import jax.numpy as jnp
from jax import lax
from jax.experimental import pallas as pl
from jax.experimental.pallas import tpu as pltpu


def _critic_kernel(x_ref, w1_ref, b1_ref, w2_ref, b2_ref, o_ref):
    # x: (TB, D)   w1: (D, H)   b1: (1, H) f32   w2: (1, H) f32   b2: (1,) SMEM
    # o: (1, 1, TB)
    h = jnp.dot(x_ref[...], w1_ref[...], preferred_element_type=jnp.float32)
    h = jnp.maximum(h + b1_ref[...], 0.0)  # bias + ReLU, f32 on the VPU
    # Linear(H, 1) as (1, H) . (TB, H)^T on the MXU -> lane-dense (1, TB).
    v = lax.dot_general(
        w2_ref[...], h,
        dimension_numbers=(((1,), (1,)), ((), ())),
        preferred_element_type=jnp.float32,
    )
    o_ref[0] = (v + b2_ref[0]).astype(o_ref.dtype)


def _round_up(x, m):
    return ((x + m - 1) // m) * m


def critic_forward(state, w1, b1, w2, b2, *, tb_max=4096):
    """Pallas implementation of Critic.forward.

    state: (B, state_dim)            (f32 or bf16 -- passed through as given)
    w1: (state_dim, 128), b1: (128,), w2: (128, 1), b2: (1,)
    returns: (B,) float32  (value per state, like torch .squeeze(-1))
    """
    B, D = state.shape
    H = w1.shape[1]

    # Small resident params: reshape/cast here is negligible traffic.
    b1_2d = b1.reshape(1, H).astype(jnp.float32)
    w2_row = w2.reshape(1, H).astype(jnp.float32)   # (H, 1) -> (1, H) row
    b2_1d = b2.reshape(1).astype(jnp.float32)       # scalar, lives in SMEM

    # Batch tile selection:
    #  - B <= tb_max: single full-batch tile (full dims are exempt from the
    #    (8,128) block rule).
    #  - otherwise: tile near tb_max with an EVEN tile count so v7x megacore
    #    can split the parallel axis across both TensorCores; TB is a multiple
    #    of 16 (sublane rule, bf16-friendly).
    if B <= tb_max:
        TB = B
    else:
        nt = pl.cdiv(B, tb_max)
        nt += nt % 2
        TB = _round_up(pl.cdiv(B, nt), 16)
    num_tiles = pl.cdiv(B, TB)

    grid_spec = pl.GridSpec(
        grid=(num_tiles,),
        in_specs=[
            pl.BlockSpec((TB, D), lambda i: (i, 0)),   # x: streamed over batch
            pl.BlockSpec((D, H), lambda i: (0, 0)),    # w1: VMEM-resident
            pl.BlockSpec((1, H), lambda i: (0, 0)),    # b1: VMEM-resident
            pl.BlockSpec((1, H), lambda i: (0, 0)),    # w2 row: VMEM-resident
            pl.BlockSpec(memory_space=pltpu.SMEM),     # b2: scalar in SMEM
        ],
        # Lane-dense output: one (1, 1, TB) row per batch tile.
        out_specs=pl.BlockSpec((1, 1, TB), lambda i: (i, 0, 0)),
    )

    out = pl.pallas_call(
        _critic_kernel,
        out_shape=jax.ShapeDtypeStruct((num_tiles, 1, TB), jnp.float32),
        grid_spec=grid_spec,
        compiler_params=pltpu.CompilerParams(
            dimension_semantics=("parallel",),  # batch tiles independent
            # Footprint at TB=4096: 2x double-buffered x tiles (~1 MiB f32),
            # h intermediate (~2 MiB) + spill headroom, tiny resident weights.
            # 32 MiB is generous headroom and stays inside v7x's 64 MiB VMEM.
            vmem_limit_bytes=32 * 1024 * 1024,
        ),
    )(state, w1, b1_2d, w2_row, b2_1d)

    # (num_tiles, 1, TB) -> flat -> drop rows padded by the last ragged tile.
    return out.reshape(-1)[:B]


def init_critic_params(key, state_dim, hidden=128):
    """Deterministic synthetic init (uniform like torch's default Linear init)."""
    k1, k2, k3, k4 = jax.random.split(key, 4)
    bound1 = 1.0 / (state_dim ** 0.5)
    bound2 = 1.0 / (hidden ** 0.5)
    w1 = jax.random.uniform(k1, (state_dim, hidden), jnp.float32, -bound1, bound1)
    b1 = jax.random.uniform(k2, (hidden,), jnp.float32, -bound1, bound1)
    w2 = jax.random.uniform(k3, (hidden, 1), jnp.float32, -bound2, bound2)
    b2 = jax.random.uniform(k4, (1,), jnp.float32, -bound2, bound2)
    return w1, b1, w2, b2


if __name__ == "__main__":
    key = jax.random.PRNGKey(0)
    k_state, k_params, k_state2 = jax.random.split(key, 3)

    state_dim = 32
    w1, b1, w2, b2 = init_critic_params(k_params, state_dim)

    def ref_fn(x):
        return (jnp.maximum(x @ w1 + b1, 0.0) @ w2 + b2)[:, 0]

    # 1) Small batch: single full-batch tile.
    batch = 8
    state = jax.random.normal(k_state, (batch, state_dim), dtype=jnp.float32)
    values = jax.block_until_ready(critic_forward(state, w1, b1, w2, b2))
    assert values.shape == (batch,)
    assert jnp.allclose(values, ref_fn(state), atol=1e-5, rtol=1e-5)

    # 2) Ragged multi-tile path (B % TB != 0) exercised via a small tb_max.
    batch2 = 40
    state2 = jax.random.normal(k_state2, (batch2, state_dim), dtype=jnp.float32)
    values2 = jax.block_until_ready(
        critic_forward(state2, w1, b1, w2, b2, tb_max=16))
    assert values2.shape == (batch2,)
    assert jnp.allclose(values2, ref_fn(state2), atol=1e-5, rtol=1e-5)

    print("KERNEL_OK")
</pallas_src>

<mosaic_0001>
module attributes {stable_mosaic.version = 11 : i64} {
  func.func @_critic_kernel(%arg0: i32, %arg1: memref<8x32xf32, #tpu.memory_space<vmem>>, %arg2: memref<32x128xf32, #tpu.memory_space<vmem>>, %arg3: memref<1x128xf32, #tpu.memory_space<vmem>>, %arg4: memref<1x128xf32, #tpu.memory_space<vmem>>, %arg5: memref<1xf32, #tpu.memory_space<smem>>, %arg6: memref<1x1x8xf32, #tpu.memory_space<vmem>>) attributes {dimension_semantics = [#tpu.dimension_semantics<parallel>], iteration_bounds = array<i64: 1>, scalar_prefetch = 0 : i64, scratch_operands = 0 : i64, tpu.core_type = #tpu.core_type<tc>, window_params = [{transform_indices = @transform_0, window_bounds = array<i64: 8, 32>}, {pipeline_mode = #tpu.pipeline_mode<synchronous>, transform_indices = @transform_1, window_bounds = array<i64: 32, 128>}, {pipeline_mode = #tpu.pipeline_mode<synchronous>, transform_indices = @transform_2, window_bounds = array<i64: 1, 128>}, {pipeline_mode = #tpu.pipeline_mode<synchronous>, transform_indices = @transform_3, window_bounds = array<i64: 1, 128>}, {transform_indices = @transform_4, window_bounds = array<i64: 1>}, {transform_indices = @transform_5, window_bounds = array<i64: 1, 1, 8>}]} {
    %c0 = arith.constant 0 : index
    %c0_0 = arith.constant 0 : index
    %0 = vector.load %arg1[%c0, %c0_0] : memref<8x32xf32, #tpu.memory_space<vmem>>, vector<8x32xf32>
    %c0_1 = arith.constant 0 : index
    %c0_2 = arith.constant 0 : index
    %1 = vector.load %arg2[%c0_1, %c0_2] : memref<32x128xf32, #tpu.memory_space<vmem>>, vector<32x128xf32>
    %cst = arith.constant dense<0.000000e+00> : vector<8x128xf32>
    %2 = tpu.matmul %0, %1, %cst {dimension_numbers = #tpu.dot_dimension_numbers<[1], [0], [0], [1], [0, 0, 1, 1], [], []>} : vector<8x32xf32>, vector<32x128xf32>, vector<8x128xf32> -> vector<8x128xf32>
    %c0_3 = arith.constant 0 : index
    %c0_4 = arith.constant 0 : index
    %3 = vector.load %arg3[%c0_3, %c0_4] : memref<1x128xf32, #tpu.memory_space<vmem>>, vector<1x128xf32>
    %4 = vector.broadcast %3 : vector<1x128xf32> to vector<8x128xf32>
    %5 = arith.addf %2, %4 : vector<8x128xf32>
    %cst_5 = arith.constant 0.000000e+00 : f32
    %6 = vector.broadcast %cst_5 : f32 to vector<8x128xf32>
    %7 = arith.maximumf %5, %6 : vector<8x128xf32>
    %c0_6 = arith.constant 0 : index
    %c0_7 = arith.constant 0 : index
    %8 = vector.load %arg4[%c0_6, %c0_7] : memref<1x128xf32, #tpu.memory_space<vmem>>, vector<1x128xf32>
    %cst_8 = arith.constant dense<0.000000e+00> : vector<1x8xf32>
    %9 = tpu.matmul %8, %7, %cst_8 {dimension_numbers = #tpu.dot_dimension_numbers<[1], [1], [0], [0], [0, 0, 1, 0], [], []>} : vector<1x128xf32>, vector<8x128xf32>, vector<1x8xf32> -> vector<1x8xf32>
    %c0_9 = arith.constant 0 : index
    %10 = memref.load %arg5[%c0_9] : memref<1xf32, #tpu.memory_space<smem>>
    %11 = vector.broadcast %10 : f32 to vector<1x8xf32>
    %12 = arith.addf %9, %11 : vector<1x8xf32>
    %c0_10 = arith.constant 0 : index
    %c0_11 = arith.constant 0 : index
    %c0_12 = arith.constant 0 : index
    %13 = vector.load %arg6[%c0_10, %c0_11, %c0_12] : memref<1x1x8xf32, #tpu.memory_space<vmem>>, vector<1x1x8xf32>
    %14 = vector.shape_cast %13 : vector<1x1x8xf32> to vector<1x8xf32>
    %15 = vector.shape_cast %12 : vector<1x8xf32> to vector<1x1x8xf32>
    tpu.vector_store %arg6[%c0_10, %c0_11, %c0_12], %15 {strides = array<i32>} : memref<1x1x8xf32, #tpu.memory_space<vmem>>, vector<1x1x8xf32>,
    return
  }
  func.func @transform_0(%arg0: i32) -> (i32, i32) {
    %c0_i32 = arith.constant 0 : i32
    %c0_i32_0 = arith.constant 0 : i32
    return %arg0, %c0_i32 : i32, i32
  }
  func.func @transform_1(%arg0: i32) -> (i32, i32) {
    %c0_i32 = arith.constant 0 : i32
    %c0_i32_0 = arith.constant 0 : i32
    %c0_i32_1 = arith.constant 0 : i32
    return %c0_i32, %c0_i32_0 : i32, i32
  }
  func.func @transform_2(%arg0: i32) -> (i32, i32) {
    %c0_i32 = arith.constant 0 : i32
    %c0_i32_0 = arith.constant 0 : i32
    %c0_i32_1 = arith.constant 0 : i32
    return %c0_i32, %c0_i32_0 : i32, i32
  }
  func.func @transform_3(%arg0: i32) -> (i32, i32) {
    %c0_i32 = arith.constant 0 : i32
    %c0_i32_0 = arith.constant 0 : i32
    %c0_i32_1 = arith.constant 0 : i32
    return %c0_i32, %c0_i32_0 : i32, i32
  }
  func.func @transform_4(%arg0: i32) -> i32 {
    %c0_i32 = arith.constant 0 : i32
    %c0_i32_0 = arith.constant 0 : i32
    return %c0_i32 : i32
  }
  func.func @transform_5(%arg0: i32) -> (i32, i32, i32) {
    %c0_i32 = arith.constant 0 : i32
    %c0_i32_0 = arith.constant 0 : i32
    %c0_i32_1 = arith.constant 0 : i32
    return %arg0, %c0_i32, %c0_i32_0 : i32, i32, i32
  }
}

</mosaic_0001>

<llo_original>
// kernel: tpu_custom_call.1
$region0: #{tpu_custom_call.1}
  #allocation0 [shape = 'u32[]', space=smem, size = 0x4, offset = 0x4, fixed_abs, tag = 'smem constant byte address 0x4 - core index']
  #allocation1 [shape = 'u32[144,128]{1,0:T(1,128)}', space=vmem, size = 0x12000, scoped, tag = 'internal scratch']
  #allocation2 [shape = 'f32[1]{0:T(128)S(6)}', space=smem, size = 0x200, scoped, tag = 'scoped memory for tpu_custom_call.1']
  %s0 = inlined_call_operand.hbm [shape: f32[8,32], index: 0, kind: input, shape index: {}]
  %s1 = inlined_call_operand.hbm [shape: f32[32,128], index: 1, kind: input, shape index: {}]
  %s2 = inlined_call_operand.vmem [shape: f32[1,128], index: 2, kind: input, shape index: {}]
  %s3 = inlined_call_operand.vmem [shape: f32[1,128], index: 3, kind: input, shape index: {}]
  %s4 = inlined_call_operand.<no memory space> [shape: f32[1], index: 4, kind: input, shape index: {}]
  %s5 = inlined_call_operand.hbm [shape: f32[1,1,8], index: 5, kind: output, shape index: {}]
  %s6 = sld [smem:[#allocation0]]
  $region38: #{tpu_custom_call.1} parent=0
    _
  %s8 = ssub.s32 1, %s6
  %s9 = scalar_select 0, %s8, %s6
  %10 = sst [smem:[#allocation2]] %s4
  $region1: #{tpu_custom_call.1} parent=0
    #allocation3 [shape = 'u8[4096]{0}', space=vmem, size = 0x1000, scoped, tag = 'input window, operand 0, single buffered']
    #allocation4 [shape = 's32[1]{0}', space=sflag, size = 0x4, scoped, tag = 'scoped memory for tpu_custom_call.1']
    #allocation5 [shape = 's32[1]{0}', space=sflag, size = 0x4, scoped, tag = 'scoped memory for tpu_custom_call.1']
    #allocation6 [shape = 'u8[16384]{0}', space=vmem, size = 0x4000, scoped, tag = 'input window, operand 1, single buffered']
    #allocation7 [shape = 's32[1]{0}', space=sflag, size = 0x4, scoped, tag = 'scoped memory for tpu_custom_call.1']
    #allocation8 [shape = 'u8[512]{0}', space=vmem, size = 0x400, scoped, tag = 'output window, operand 0, single buffered']
    %11 = vsyncpa [#allocation4], 0
    %12 = vsyncpa [#allocation7], 0
    %13 = vsyncpa [#allocation5], 0
    // Predicated region
    $region2: #{tpu_custom_call.1} parent=1 // pred_check
      _
    $region3: #{tpu_custom_call.1} parent=1 // pred_check_branch
      %15 = sbr.rel (0) target = $region5
    $region4: #{tpu_custom_call.1} parent=1 // pred_region
      %s17 = ssub.s32 128, 128
      %18 = vsyncadd [#allocation4], %s17
      %s20 = sshll.u32 [#allocation3], 4
      %s21 = int_to_ptr.vmem [resolvable:$true] %s20
      %23 = dma.hbm_to_vmem [thread:$0]  %s0, 128, %s21, [#allocation4]
    $region5: #{tpu_custom_call.1} parent=1 // pred_fallthru
      _
    // Predicated region
    $region6: #{tpu_custom_call.1} parent=1 // pred_check
      _
    $region7: #{tpu_custom_call.1} parent=1 // pred_check_branch
      %25 = sbr.rel (0) target = $region9
    $region8: #{tpu_custom_call.1} parent=1 // pred_region
      %s27 = ssub.s32 512, 512
      %28 = vsyncadd [#allocation7], %s27
      %s29 = sshll.u32 [#allocation6], 4
      %s30 = int_to_ptr.vmem [resolvable:$true] %s29
      %35 = dma.hbm_to_vmem [thread:$0]  %s1, 512, %s30, [#allocation7], 128, 128, 8
    $region9: #{tpu_custom_call.1} parent=1 // pred_fallthru
      _
    // Predicated region
    $region10: #{tpu_custom_call.1} parent=1 // pred_check
      _
    $region11: #{tpu_custom_call.1} parent=1 // pred_check_branch
      %37 = sbr.rel (0) target = $region13
    $region12: #{tpu_custom_call.1} parent=1 // pred_region
      _
    $region13: #{tpu_custom_call.1} parent=1 // pred_fallthru
      _
    // Predicated region
    $region14: #{tpu_custom_call.1} parent=1 // pred_check
      _
    $region15: #{tpu_custom_call.1} parent=1 // pred_check_branch
      %39 = sbr.rel (0) target = $region17
    $region16: #{tpu_custom_call.1} parent=1 // pred_region
      _
    $region17: #{tpu_custom_call.1} parent=1 // pred_fallthru
      _
    // Predicated region
    $region18: #{tpu_custom_call.1} parent=1 // pred_check
      _
    $region19: #{tpu_custom_call.1} parent=1 // pred_check_branch
      %41 = sbr.rel (0) target = $region21
    $region20: #{tpu_custom_call.1} parent=1 // pred_region
      _
    $region21: #{tpu_custom_call.1} parent=1 // pred_fallthru
      _
    // Predicated region
    $region22: #{tpu_custom_call.1} parent=1 // pred_check
      _
    $region23: #{tpu_custom_call.1} parent=1 // pred_check_branch
      %43 = sbr.rel (0) target = $region25
    $region24: #{tpu_custom_call.1} parent=1 // pred_region
      %44 = dma.done [#allocation4], 128
    $region25: #{tpu_custom_call.1} parent=1 // pred_fallthru
      _
    // Predicated region
    $region26: #{tpu_custom_call.1} parent=1 // pred_check
      _
    $region27: #{tpu_custom_call.1} parent=1 // pred_check_branch
      %46 = sbr.rel (0) target = $region29
    $region28: #{tpu_custom_call.1} parent=1 // pred_region
      %47 = dma.done [#allocation7], 512
    $region29: #{tpu_custom_call.1} parent=1 // pred_fallthru
      _
    %v48 = vld [vmem:[#allocation3] sm:$0xff]
    %v49 = vld [vmem:[#allocation6] sm:$0xff]
    %v50 = vld [vmem:[#allocation6 + $0x8] sm:$0xff]
    %v51 = vld [vmem:[#allocation6 + $0x10] sm:$0xff]
    %v52 = vld [vmem:[#allocation6 + $0x18] sm:$0xff]
    %v53 = vld [vmem:[%s2] sm:$0x1]
    %v55 = vlaneseq
    %v56 = vshrl.u32 %v55, 7
    %v57 = vsub.s32 0, %v56
    %v58 = vrot.slane %v53, %v57
    %vm60 = vcmask 261120
    %v62 = vsel %vm60, %v48, 0
    %64 = vmatprep.subr.mxu0 0.0
    %65 = vmatpush1.msra.mxu0 %v49
    %66 = vmatprep.subr.mxu0 0.0
    %67 = vmatpush1.msra.mxu0 %v50
    %68 = vmatprep.subr.mxu0 0.0
    %69 = vmatpush1.msra.mxu0 %v51
    %70 = vmatprep.subr.mxu0 0.0
    %71 = vmatpush1.msra.mxu0 %v52
    %72 = vmatprep.subr.mxu0 0.0
    %73 = vmatpush1.msra.mxu0 0.0
    %74 = vmatprep.subr.mxu0 0.0
    %75 = vmatpush1.msra.mxu0 0.0
    %76 = vmatprep.subr.mxu0 0.0
    %77 = vmatpush1.msra.mxu0 0.0
    %78 = vmatprep.subr.mxu0 0.0
    %79 = vmatpush1.msra.mxu0 0.0
    %80 = vmatprep.subr.mxu0 0.0
    %81 = vmatpush1.msra.mxu0 0.0
    %82 = vmatprep.subr.mxu0 0.0
    %83 = vmatpush1.msra.mxu0 0.0
    %84 = vmatprep.subr.mxu0 0.0
    %85 = vmatpush1.msra.mxu0 0.0
    %86 = vmatprep.subr.mxu0 0.0
    %87 = vmatpush1.msra.mxu0 0.0
    %88 = vmatprep.subr.mxu0 0.0
    %89 = vmatpush1.msra.mxu0 0.0
    %90 = vmatprep.subr.mxu0 0.0
    %91 = vmatpush1.msra.mxu0 0.0
    %92 = vmatprep.subr.mxu0 0.0
    %93 = vmatpush1.msra.mxu0 0.0
    %94 = vmatprep.subr.mxu0 0.0
    %95 = vmatpush1.msra.mxu0 0.0
    %96 = vmatprep.subr.mxu0 0.0
    %97 = vmatpush1.msra.mxu0 0.0
    %98 = vmatprep.subr.mxu0 0.0
    %99 = vmatpush1.msra.mxu0 0.0
    %100 = vmatprep.subr.mxu0 0.0
    %101 = vmatpush1.msra.mxu0 0.0
    %102 = vmatprep.subr.mxu0 0.0
    %103 = vmatpush1.msra.mxu0 0.0
    %104 = vmatprep.subr.mxu0 0.0
    %105 = vmatpush1.msra.mxu0 0.0
    %106 = vmatprep.subr.mxu0 0.0
    %107 = vmatpush1.msra.mxu0 0.0
    %108 = vmatprep.subr.mxu0 0.0
    %109 = vmatpush1.msra.mxu0 0.0
    %110 = vmatprep.subr.mxu0 0.0
    %111 = vmatpush1.msra.mxu0 0.0
    %112 = vmatprep.subr.mxu0 0.0
    %113 = vmatpush1.msra.mxu0 0.0
    %114 = vmatprep.subr.mxu0 0.0
    %115 = vmatpush1.msra.mxu0 0.0
    %116 = vmatprep.subr.mxu0 0.0
    %117 = vmatpush1.msra.mxu0 0.0
    %118 = vmatprep.subr.mxu0 0.0
    %119 = vmatpush1.msra.mxu0 0.0
    %120 = vmatprep.subr.mxu0 0.0
    %121 = vmatpush1.msra.mxu0 0.0
    %122 = vmatprep.subr.mxu0 0.0
    %123 = vmatpush1.msra.mxu0 0.0
    %124 = vmatprep.subr.mxu0 0.0
    %125 = vmatpush1.msra.mxu0 0.0
    %126 = vmatprep.subr.mxu0 0.0
    %127 = vmatpush1.msra.mxu0 0.0
    %128 = vmatprep.mubr.f32.mxu0 0.0
    %129 = vmatmul.mubr.f32.gmra.mrb[0].mxu0 %v62
    %v130 = vpop.f32.mrb[0].mxu0
    %v131 = vadd.f32 %v58, %v130
    %v132 = vpop.f32.mrb[0].mxu0
    %133 = vdwg.mxu0
    %v134 = vmax.f32 %v131, 0.0
    %v135 = vld [vmem:[%s3] sm:$0x1]
    %s136 = sld [smem:[#allocation2]]
    %v137 = vstv %s136
    %138 = vmatprep.subr.mxu0 0.0
    %139 = vmatpush1.xpose.msra.mxu0 %v134
    %140 = vmatprep.subr.mxu0 0.0
    %141 = vmatpush1.xpose.msra.mxu0 0.0
    %142 = vmatprep.subr.mxu0 0.0
    %143 = vmatpush1.xpose.msra.mxu0 0.0
    %144 = vmatprep.subr.mxu0 0.0
    %145 = vmatpush1.xpose.msra.mxu0 0.0
    %146 = vmatprep.subr.mxu0 0.0
    %147 = vmatpush1.xpose.msra.mxu0 0.0
    %148 = vmatprep.subr.mxu0 0.0
    %149 = vmatpush1.xpose.msra.mxu0 0.0
    %150 = vmatprep.subr.mxu0 0.0
    %151 = vmatpush1.xpose.msra.mxu0 0.0
    %152 = vmatprep.subr.mxu0 0.0
    %153 = vmatpush1.xpose.msra.mxu0 0.0
    %154 = vmatprep.subr.mxu0 0.0
    %155 = vmatpush1.xpose.msra.mxu0 0.0
    %156 = vmatprep.subr.mxu0 0.0
    %157 = vmatpush1.xpose.msra.mxu0 0.0
    %158 = vmatprep.subr.mxu0 0.0
    %159 = vmatpush1.xpose.msra.mxu0 0.0
    %160 = vmatprep.subr.mxu0 0.0
    %161 = vmatpush1.xpose.msra.mxu0 0.0
    %162 = vmatprep.subr.mxu0 0.0
    %163 = vmatpush1.xpose.msra.mxu0 0.0
    %164 = vmatprep.subr.mxu0 0.0
    %165 = vmatpush1.xpose.msra.mxu0 0.0
    %166 = vmatprep.subr.mxu0 0.0
    %167 = vmatpush1.xpose.msra.mxu0 0.0
    %168 = vmatprep.subr.mxu0 0.0
    %169 = vmatpush1.xpose.msra.mxu0 0.0
    %170 = vmatprep.subr.mxu0 0.0
    %171 = vmatpush1.xpose.msra.mxu0 0.0
    %172 = vmatprep.subr.mxu0 0.0
    %173 = vmatpush1.xpose.msra.mxu0 0.0
    %174 = vmatprep.subr.mxu0 0.0
    %175 = vmatpush1.xpose.msra.mxu0 0.0
    %176 = vmatprep.subr.mxu0 0.0
    %177 = vmatpush1.xpose.msra.mxu0 0.0
    %178 = vmatprep.subr.mxu0 0.0
    %179 = vmatpush1.xpose.msra.mxu0 0.0
    %180 = vmatprep.subr.mxu0 0.0
    %181 = vmatpush1.xpose.msra.mxu0 0.0
    %182 = vmatprep.subr.mxu0 0.0
    %183 = vmatpush1.xpose.msra.mxu0 0.0
    %184 = vmatprep.subr.mxu0 0.0
    %185 = vmatpush1.xpose.msra.mxu0 0.0
    %186 = vmatprep.subr.mxu0 0.0
    %187 = vmatpush1.xpose.msra.mxu0 0.0
    %188 = vmatprep.subr.mxu0 0.0
    %189 = vmatpush1.xpose.msra.mxu0 0.0
    %190 = vmatprep.subr.mxu0 0.0
    %191 = vmatpush1.xpose.msra.mxu0 0.0
    %192 = vmatprep.subr.mxu0 0.0
    %193 = vmatpush1.xpose.msra.mxu0 0.0
    %194 = vmatprep.subr.mxu0 0.0
    %195 = vmatpush1.xpose.msra.mxu0 0.0
    %196 = vmatprep.subr.mxu0 0.0
    %197 = vmatpush1.xpose.msra.mxu0 0.0
    %198 = vmatprep.subr.mxu0 0.0
    %199 = vmatpush1.xpose.msra.mxu0 0.0
    %200 = vmatprep.subr.mxu0 0.0
    %201 = vmatpush1.xpose.msra.mxu0 0.0
    %202 = vmatprep.mubr.f32.mxu0 0.0
    %203 = vmatmul.mubr.f32.gmra.mrb[0].mxu0 %v135
    %v204 = vpop.f32.mrb[0].mxu0
    %v205 = vadd.f32 %v137, %v204
    %v206 = vpop.f32.mrb[0].mxu0
    %207 = vdwg.mxu0
    %vm208 = vcmask 57344
    %209 = vst.msk [vmem:[#allocation8] sm:$0x1] %vm208, %v205
    // Predicated region
    $region30: #{tpu_custom_call.1} parent=1 // pred_check
      _
    $region31: #{tpu_custom_call.1} parent=1 // pred_check_branch
      %211 = sbr.rel (0) target = $region33
    $region32: #{tpu_custom_call.1} parent=1 // pred_region
      %s213 = ssub.s32 16, 16
      %214 = vsyncadd [#allocation5], %s213
      %s216 = sshll.u32 [#allocation8], 4
      %s217 = int_to_ptr.vmem [resolvable:$true] %s216
      %219 = dma.vmem_to_hbm [thread:$0]  %s217, 16, %s5, [#allocation5]
    $region33: #{tpu_custom_call.1} parent=1 // pred_fallthru
      _
    // Predicated region
    $region34: #{tpu_custom_call.1} parent=1 // pred_check
      _
    $region35: #{tpu_custom_call.1} parent=1 // pred_check_branch
      %221 = sbr.rel (0) target = $region37
    $region36: #{tpu_custom_call.1} parent=1 // pred_region
      %222 = dma.done [#allocation5], 16
    $region37: #{tpu_custom_call.1} parent=1 // pred_fallthru
      _
    %223 = vsyncpa [#allocation4], 1
    %224 = vsyncpa [#allocation7], 1
    %225 = vsyncpa [#allocation5], 1

</llo_original>
